<compile_context>
chip_gen: v5e
topology: v5e:2x2
jax: 0.10.0
libtpu: 0.0.40
codegen_flags: <defaults>
</compile_context>

<pallas_src>
import jax
import jax.numpy as jnp
from jax import lax
from jax.experimental import pallas as pl
from jax.experimental.pallas import tpu as pltpu

_LANES = 128
_ACC_ROWS = 32      # 4 independent (8,128) f32 accumulators; a multiple of 32 rows
                    # is sublane-safe for f32 / bf16 / int8 packed layouts.
_TILE_ROWS = 4096   # 4096x128 f32 = 2 MiB per input block; 2 inputs x 2 buffers
                    # = 8 MiB -> under the 16/32/32 MiB scoped-VMEM defaults.


def _l1_whole_array_kernel(pred_ref, gt_ref, out_ref):
    # Small-input path: the whole (rows, 128) array is a single VMEM block
    # ("full array dims" is always a legal block shape, any row count/dtype).
    d = pred_ref[...].astype(jnp.float32) - gt_ref[...].astype(jnp.float32)
    out_ref[...] = jnp.sum(jnp.abs(d), axis=0, keepdims=True)   # (1, 128)


def _make_tiled_kernel(rows, tile_rows, num_tiles):
    """Kernel for the large-input path (rows > tile_rows). All args are static."""
    num_slabs = tile_rows // _ACC_ROWS           # tile_rows is a multiple of 32
    tail_rows = rows - (num_tiles - 1) * tile_rows   # valid rows in last block
    has_tail = tail_rows != tile_rows

    def kernel(pred_ref, gt_ref, out_ref):
        def slab_abs(k):
            # Read a (32,128) slab straight from the refs -> diff/abs fuse into
            # the accumulate, no full-tile f32 temporary in VMEM.
            r = pl.multiple_of(k * _ACC_ROWS, _ACC_ROWS)
            p = pred_ref[pl.ds(r, _ACC_ROWS), :].astype(jnp.float32)
            g = gt_ref[pl.ds(r, _ACC_ROWS), :].astype(jnp.float32)
            return jnp.abs(p - g)

        zeros = jnp.zeros((_ACC_ROWS, _LANES), jnp.float32)

        def run_plain():
            out_ref[...] = lax.fori_loop(
                0, num_slabs, lambda k, acc: acc + slab_abs(k), zeros, unroll=8)

        if not has_tail:
            run_plain()
        else:
            i = pl.program_id(0)
            # Hoisted once; never re-broadcast inside the loop.
            row_iota = lax.broadcasted_iota(jnp.int32, (_ACC_ROWS, _LANES), 0)

            def masked_body(k, acc):
                # Last block reads past the array: zero out the garbage rows.
                valid = (row_iota + k * _ACC_ROWS) < tail_rows
                return acc + jnp.where(valid, slab_abs(k), 0.0)

            @pl.when(i < num_tiles - 1)
            def _():
                run_plain()

            @pl.when(i == num_tiles - 1)
            def _():
                out_ref[...] = lax.fori_loop(0, num_slabs, masked_body, zeros,
                                             unroll=8)

    return kernel


def l1_loss_wae(pred_img, gt_img):
    """pred_img, gt_img: (N, C, H, W), any float dtype. Returns a f32 scalar."""
    assert pred_img.shape == gt_img.shape
    n_batch = pred_img.shape[0]
    total = pred_img.size

    pred_flat = pred_img.reshape(-1)
    gt_flat = gt_img.reshape(-1)

    # Lane alignment only: the flat length must be a multiple of 128 to present
    # a lane-dense (rows, 128) view. For image tensors this is almost always a
    # no-op (zero-pad is L1-neutral: |0-0| = 0).
    # TODO(synk): handle total % 128 != 0 with a tiny tail kernel instead of a
    # full-array jnp.pad copy (rare case).
    pad = (-total) % _LANES
    if pad:
        pred_flat = jnp.pad(pred_flat, (0, pad))
        gt_flat = jnp.pad(gt_flat, (0, pad))
    rows = (total + pad) // _LANES
    pred2d = pred_flat.reshape(rows, _LANES)
    gt2d = gt_flat.reshape(rows, _LANES)

    if rows <= _TILE_ROWS:
        # Small input: single full-array block, one (1,128) row of partials.
        partials = pl.pallas_call(
            _l1_whole_array_kernel,
            out_shape=jax.ShapeDtypeStruct((1, _LANES), jnp.float32),
        )(pred2d, gt2d)
    else:
        num_tiles = pl.cdiv(rows, _TILE_ROWS)
        partials = pl.pallas_call(
            _make_tiled_kernel(rows, _TILE_ROWS, num_tiles),
            out_shape=jax.ShapeDtypeStruct((num_tiles * _ACC_ROWS, _LANES),
                                           jnp.float32),
            grid_spec=pltpu.PrefetchScalarGridSpec(
                num_scalar_prefetch=0,
                grid=(num_tiles,),
                in_specs=[
                    pl.BlockSpec((_TILE_ROWS, _LANES), lambda i: (i, 0)),
                    pl.BlockSpec((_TILE_ROWS, _LANES), lambda i: (i, 0)),
                ],
                # Each grid step owns its private (32,128) partial-sum block:
                # no shared accumulator, so the grid axis is truly parallel
                # (2-TC shardable on v7x; consider pltpu.CORE_PARALLEL if a
                # profile shows one TC idle).
                out_specs=pl.BlockSpec((_ACC_ROWS, _LANES), lambda i: (i, 0)),
            ),
            compiler_params=pltpu.CompilerParams(
                dimension_semantics=("parallel",)),
        )(pred2d, gt2d)

    # One final tiny reduction over the partials + uniform 0.02 / N scaling.
    return jnp.sum(partials) * (0.02 / n_batch)


def _reference(pred_img, gt_img):
    # Pure-JAX mirror of the PyTorch module.
    l1 = jnp.sum(jnp.abs(pred_img.astype(jnp.float32) -
                         gt_img.astype(jnp.float32)), axis=(1, 2, 3))
    return 0.02 * jnp.mean(l1)


if __name__ == "__main__":
    key = jax.random.PRNGKey(0)
    k1, k2, k3, k4 = jax.random.split(key, 4)

    # Small shape (single-block path), matching the module's typical usage.
    N, C, H, W = 2, 4, 16, 16
    pred_img = jax.random.normal(k1, (N, C, H, W), dtype=jnp.float32)
    gt_img = jax.random.normal(k2, (N, C, H, W), dtype=jnp.float32)
    loss = jax.block_until_ready(l1_loss_wae(pred_img, gt_img))
    ref = _reference(pred_img, gt_img)
    assert jnp.allclose(loss, ref, rtol=1e-5, atol=1e-5), (loss, ref)

    # bf16 inputs take the same single-HBM-read path (upcast happens in-kernel).
    loss_bf16 = jax.block_until_ready(
        l1_loss_wae(pred_img.astype(jnp.bfloat16), gt_img.astype(jnp.bfloat16)))
    ref_bf16 = _reference(pred_img.astype(jnp.bfloat16),
                          gt_img.astype(jnp.bfloat16))
    assert jnp.allclose(loss_bf16, ref_bf16, rtol=1e-4, atol=1e-4), (loss_bf16,
                                                                     ref_bf16)

    # Medium shape exercising the tiled path with a masked partial last block
    # (rows = 5120 -> two 4096-row tiles, only 1024 valid rows in the last one).
    N2, C2, H2, W2 = 2, 4, 320, 256
    pred2 = jax.random.normal(k3, (N2, C2, H2, W2), dtype=jnp.float32)
    gt2 = jax.random.normal(k4, (N2, C2, H2, W2), dtype=jnp.float32)
    loss2 = jax.block_until_ready(l1_loss_wae(pred2, gt2))
    ref2 = _reference(pred2, gt2)
    assert jnp.allclose(loss2, ref2, rtol=1e-4, atol=1e-3), (loss2, ref2)

    print("KERNEL_OK")
</pallas_src>

<mosaic_0001>
module attributes {stable_mosaic.version = 11 : i64} {
  func.func @_l1_whole_array_kernel(%arg0: memref<16x128xf32, #tpu.memory_space<vmem>>, %arg1: memref<16x128xf32, #tpu.memory_space<vmem>>, %arg2: memref<1x128xf32, #tpu.memory_space<vmem>>) attributes {dimension_semantics = [], scalar_prefetch = 0 : i64, scratch_operands = 0 : i64, tpu.core_type = #tpu.core_type<tc>} {
    %c0 = arith.constant 0 : index
    %c0_0 = arith.constant 0 : index
    %0 = vector.load %arg0[%c0, %c0_0] : memref<16x128xf32, #tpu.memory_space<vmem>>, vector<16x128xf32>
    %c0_1 = arith.constant 0 : index
    %c0_2 = arith.constant 0 : index
    %1 = vector.load %arg1[%c0_1, %c0_2] : memref<16x128xf32, #tpu.memory_space<vmem>>, vector<16x128xf32>
    %2 = arith.subf %0, %1 : vector<16x128xf32>
    %3 = math.absf %2 : vector<16x128xf32>
    %cst = arith.constant dense<0.000000e+00> : vector<128xf32>
    %4 = vector.multi_reduction <add>, %3, %cst [0] : vector<16x128xf32> to vector<128xf32>
    %5 = vector.shape_cast %4 : vector<128xf32> to vector<1x128xf32>
    %c0_3 = arith.constant 0 : index
    %c0_4 = arith.constant 0 : index
    %6 = vector.load %arg2[%c0_3, %c0_4] : memref<1x128xf32, #tpu.memory_space<vmem>>, vector<1x128xf32>
    tpu.vector_store %arg2[%c0_3, %c0_4], %5 {strides = array<i32>} : memref<1x128xf32, #tpu.memory_space<vmem>>, vector<1x128xf32>,
    return
  }
}

</mosaic_0001>

<llo_original>
// kernel: tpu_custom_call.1
$region0: #{tpu_custom_call.1}
  #allocation0 [shape = 'u32[]', space=smem, size = 0x4, offset = 0x4, fixed_abs, tag = 'smem constant byte address 0x4 - core index']
  #allocation1 [shape = 'u32[72,128]{1,0:T(1,128)}', space=vmem, size = 0x9000, scoped, tag = 'internal scratch']
  %s0 = inlined_call_operand.hbm [shape: f32[16,128], index: 0, kind: input, shape index: {}]
  %s1 = inlined_call_operand.hbm [shape: f32[16,128], index: 1, kind: input, shape index: {}]
  %s2 = inlined_call_operand.hbm [shape: f32[1,128], index: 2, kind: output, shape index: {}]
  %s3 = sld [smem:[#allocation0]]
  $region26: #{tpu_custom_call.1} parent=0
    _
  %s5 = ssub.s32 1, %s3
  %s6 = scalar_select 0, %s5, %s3
  $region1: #{tpu_custom_call.1} parent=0
    #allocation2 [shape = 'u8[8192]{0}', space=vmem, size = 0x2000, scoped, tag = 'input window, operand 0, single buffered']
    #allocation3 [shape = 's32[1]{0}', space=sflag, size = 0x4, scoped, tag = 'scoped memory for tpu_custom_call.1']
    #allocation4 [shape = 's32[1]{0}', space=sflag, size = 0x4, scoped, tag = 'scoped memory for tpu_custom_call.1']
    #allocation5 [shape = 'u8[8192]{0}', space=vmem, size = 0x2000, scoped, tag = 'input window, operand 1, single buffered']
    #allocation6 [shape = 's32[1]{0}', space=sflag, size = 0x4, scoped, tag = 'scoped memory for tpu_custom_call.1']
    #allocation7 [shape = 'u8[512]{0}', space=vmem, size = 0x400, scoped, tag = 'output window, operand 0, single buffered']
    %7 = vsyncpa [#allocation3], 0
    %8 = vsyncpa [#allocation6], 0
    %9 = vsyncpa [#allocation4], 0
    // Predicated region
    $region2: #{tpu_custom_call.1} parent=1 // pred_check
      _
    $region3: #{tpu_custom_call.1} parent=1 // pred_check_branch
      %11 = sbr.rel (0) target = $region5
    $region4: #{tpu_custom_call.1} parent=1 // pred_region
      %13 = vsyncadd [#allocation3], 0
      %s14 = sshll.u32 %s0, 4
      %s15 = int_to_ptr.hbm [resolvable:$true] %s14
      %s16 = sshll.u32 [#allocation2], 4
      %s17 = int_to_ptr.vmem [resolvable:$true] %s16
      %22 = dma.hbm_to_vmem [thread:$0]  %s15, 256, %s17, [#allocation3], 128, 128, 8
    $region5: #{tpu_custom_call.1} parent=1 // pred_fallthru
      _
    // Predicated region
    $region6: #{tpu_custom_call.1} parent=1 // pred_check
      _
    $region7: #{tpu_custom_call.1} parent=1 // pred_check_branch
      %24 = sbr.rel (0) target = $region9
    $region8: #{tpu_custom_call.1} parent=1 // pred_region
      %26 = vsyncadd [#allocation6], 0
      %s27 = sshll.u32 %s1, 4
      %s28 = int_to_ptr.hbm [resolvable:$true] %s27
      %s29 = sshll.u32 [#allocation5], 4
      %s30 = int_to_ptr.vmem [resolvable:$true] %s29
      %35 = dma.hbm_to_vmem [thread:$0]  %s28, 256, %s30, [#allocation6], 128, 128, 8
    $region9: #{tpu_custom_call.1} parent=1 // pred_fallthru
      _
    // Predicated region
    $region10: #{tpu_custom_call.1} parent=1 // pred_check
      _
    $region11: #{tpu_custom_call.1} parent=1 // pred_check_branch
      %37 = sbr.rel (0) target = $region13
    $region12: #{tpu_custom_call.1} parent=1 // pred_region
      %39 = dma.done [#allocation3], 256
    $region13: #{tpu_custom_call.1} parent=1 // pred_fallthru
      _
    // Predicated region
    $region14: #{tpu_custom_call.1} parent=1 // pred_check
      _
    $region15: #{tpu_custom_call.1} parent=1 // pred_check_branch
      %41 = sbr.rel (0) target = $region17
    $region16: #{tpu_custom_call.1} parent=1 // pred_region
      %43 = dma.done [#allocation6], 256
    $region17: #{tpu_custom_call.1} parent=1 // pred_fallthru
      _
    %v44 = vld [vmem:[#allocation2] sm:$0xff]
    %v45 = vld [vmem:[#allocation2 + $0x8] sm:$0xff]
    %v46 = vld [vmem:[#allocation5] sm:$0xff]
    %v47 = vld [vmem:[#allocation5 + $0x8] sm:$0xff]
    %v48 = vsub.f32 %v44, %v46
    %v49 = vsub.f32 %v45, %v47
    %v50 = vand.u32 2147483647, %v48
    %v51 = vand.u32 2147483647, %v49
    %v52 = vadd.f32 %v50, %v51
    %v53 = vrot.slane %v52, 4
    %v54 = vadd.f32 %v52, %v53
    %v55 = vrot.slane %v54, 2
    %v56 = vadd.f32 %v54, %v55
    %v57 = vrot.slane %v56, 1
    %v58 = vadd.f32 %v56, %v57
    %59 = vst [vmem:[#allocation7] sm:$0x1] %v58
    // Predicated region
    $region18: #{tpu_custom_call.1} parent=1 // pred_check
      _
    $region19: #{tpu_custom_call.1} parent=1 // pred_check_branch
      %61 = sbr.rel (0) target = $region21
    $region20: #{tpu_custom_call.1} parent=1 // pred_region
      %63 = vsyncadd [#allocation4], 0
      %s65 = sshll.u32 [#allocation7], 4
      %s66 = int_to_ptr.vmem [resolvable:$true] %s65
      %s67 = sshll.u32 %s2, 4
      %s68 = int_to_ptr.hbm [resolvable:$true] %s67
      %70 = dma.vmem_to_hbm [thread:$0]  %s66, 16, %s68, [#allocation4]
    $region21: #{tpu_custom_call.1} parent=1 // pred_fallthru
      _
    // Predicated region
    $region22: #{tpu_custom_call.1} parent=1 // pred_check
      _
    $region23: #{tpu_custom_call.1} parent=1 // pred_check_branch
      %72 = sbr.rel (0) target = $region25
    $region24: #{tpu_custom_call.1} parent=1 // pred_region
      %74 = dma.done [#allocation4], 16
    $region25: #{tpu_custom_call.1} parent=1 // pred_fallthru
      _
    %75 = vsyncpa [#allocation3], 1
    %76 = vsyncpa [#allocation6], 1
    %77 = vsyncpa [#allocation4], 1

</llo_original>
